<compile_context>
chip_gen: v7x
topology: tpu7x:2x2x1
jax: 0.10.0
libtpu: 0.0.40
codegen_flags: <defaults>
</compile_context>

<pallas_src>
import functools

import numpy as np

import jax
import jax.numpy as jnp
from jax.experimental import pallas as pl
from jax.experimental.pallas import tpu as pltpu


# --------------------------------------------------------------------------
# Kernel
# --------------------------------------------------------------------------
def _upsample_kernel(x_ref, rep_ref, o_ref, *, copies: int):
    """x_ref: (RT, Cin); rep_ref: (Cin, S) 0/1 selection; o_ref: (RT, copies*S).

    up = x @ rep selects (and width-replicates) input elements; the result is
    then stored `copies` times at consecutive lane offsets (height fold).
    All offsets are static -> dense stores, no per-step index math.
    """
    seg = rep_ref.shape[1]
    up = jnp.dot(x_ref[...], rep_ref[...], preferred_element_type=o_ref.dtype)
    for a in range(copies):                      # small static unroll (= sh or 1)
        o_ref[:, a * seg:(a + 1) * seg] = up


# --------------------------------------------------------------------------
# Host-side helpers
# --------------------------------------------------------------------------
def _as_int_scale(s) -> int:
    f = float(s)
    if not f.is_integer() or f < 1:
        raise NotImplementedError("Only positive integer scale factors are supported.")
    return int(f)


def _vmem_capacity_bytes() -> int:
    """Best-effort physical VMEM query; conservative fallback (v7x-sized)."""
    try:
        info = pltpu.get_tpu_info()
        for attr in ("vmem_capacity_bytes", "vmem_size_bytes", "vmem_bytes"):
            v = getattr(info, attr, None)
            if v:
                return int(v)
    except Exception:
        pass
    return 64 << 20


def _width_rep(w_in: int, sw: int, dtype) -> jnp.ndarray:
    """(W, W*sw) 0/1 matrix: rep[i, j] = 1 iff j // sw == i."""
    j = np.arange(w_in * sw)
    i = np.arange(w_in)
    mask = (j[None, :] // sw) == i[:, None]
    return jnp.asarray(mask, dtype=dtype)


def _folded_rep(g: int, w_in: int, sh: int, sw: int, dtype) -> jnp.ndarray:
    """Block-diagonal (G*W, G*sh*sw*W) selection matrix (incl. the sh-fold)."""
    w_out = w_in * sw
    k = sh * w_out
    i = np.arange(g * w_in)
    j = np.arange(g * k)
    src = (j // k) * w_in + ((j % k) % w_out) // sw   # source flat index per output col
    mask = src[None, :] == i[:, None]
    return jnp.asarray(mask, dtype=dtype)


def _pick_row_fold(num_rows: int, w_in: int, k_per_row: int) -> int:
    """Smallest divisor G of num_rows with G*k >= 256 (lane-dense output),
    bounded so the folded selection matrix stays small."""
    best = 1
    limit = min(num_rows, 2048)
    for g in range(1, limit + 1):
        if num_rows % g:
            continue
        if g * k_per_row > 4096 or g * w_in > 4096:
            break
        best = g
        if g * k_per_row >= 256:
            break
    return best


def _pick_row_tile(num_rows: int, per_row_bytes: int, budget: int) -> int:
    """Largest row tile (multiple of 8, dividing num_rows) within the VMEM
    budget, while guaranteeing enough grid steps for pipelining / megacore."""
    if num_rows <= 8:
        return num_rows                      # full-extent block is always legal
    max_rows = max(8, budget // max(per_row_bytes, 1))
    cap = min(num_rows, max_rows)
    if num_rows >= 64:
        cap = min(cap, max(8, num_rows // 8))   # >= 8 grid steps
    elif num_rows >= 16:
        cap = min(cap, max(8, num_rows // 2))   # at least 2 grid steps
    cap = max(8, cap - cap % 8)
    for d in range(cap, 7, -8):
        if num_rows % d == 0:
            return d
    return num_rows                          # no multiple-of-8 divisor: full block


# --------------------------------------------------------------------------
# Public entry point
# --------------------------------------------------------------------------
def upsample_nearest(x: jnp.ndarray, scale_factor, mode: str = "nearest") -> jnp.ndarray:
    """Pallas equivalent of F.interpolate(x, scale_factor, mode='nearest')."""
    assert mode == "nearest", "only mode='nearest' is implemented"
    if not jnp.issubdtype(x.dtype, jnp.floating):
        raise NotImplementedError("Only floating dtypes are supported.")

    N, C, H, W = x.shape
    if isinstance(scale_factor, (tuple, list)):
        sh, sw = (_as_int_scale(s) for s in scale_factor)
    else:
        sh = sw = _as_int_scale(scale_factor)

    H_out, W_out = H * sh, W * sw
    K = sh * W_out                    # output columns per input row (row-major)
    R = N * C * H                     # input rows
    isz = jnp.dtype(x.dtype).itemsize

    capacity = _vmem_capacity_bytes()
    # Generation-aware tile budget: bigger on 128 MiB-VMEM chips (v5e/v6e),
    # tighter on 64 MiB-VMEM chips (v7x, 2 TCs each with their own buffers).
    budget = (16 << 20) if capacity >= (100 << 20) else (10 << 20)

    if W_out >= 128:
        # Wide path: matmul does width replication only; sh copies via stores.
        G = 1
        rep = _width_rep(W, sw, x.dtype)              # (W, W_out)
        copies = sh
        in_cols, out_cols = W, K
    else:
        # Small-plane path: fold G rows into lanes so stores are lane-dense.
        G = _pick_row_fold(R, W, K)
        rep = _folded_rep(G, W, sh, sw, x.dtype)      # (G*W, G*K)
        copies = 1
        in_cols, out_cols = G * W, G * K

    Rf = R // G
    x_rows = x.reshape(Rf, in_cols)                   # contiguous regrouping, free

    # Per-row VMEM: double-buffered input + output tiles + matmul intermediate.
    per_row = (2 * in_cols + 2 * out_cols + rep.shape[1]) * isz
    RT = _pick_row_tile(Rf, per_row, budget)
    grid = Rf // RT if Rf % RT == 0 else 1
    if grid == 1:
        RT = Rf

    rep_bytes = rep.shape[0] * rep.shape[1] * isz
    used = RT * per_row + 2 * rep_bytes
    vmem_limit = max(used + (8 << 20), 16 << 20)
    hard_cap = (64 << 20) if capacity >= (100 << 20) else (30 << 20)
    vmem_limit = min(vmem_limit, hard_cap)
    vmem_limit = int(max(vmem_limit, used + (2 << 20)))

    cost = pl.CostEstimate(
        flops=2 * Rf * rep.shape[0] * rep.shape[1],
        transcendentals=0,
        bytes_accessed=(Rf * in_cols + Rf * out_cols + rep.shape[0] * rep.shape[1]) * isz,
    )

    out_rows = pl.pallas_call(
        functools.partial(_upsample_kernel, copies=copies),
        out_shape=jax.ShapeDtypeStruct((Rf, out_cols), x.dtype),
        grid=(grid,),
        in_specs=[
            pl.BlockSpec((RT, in_cols), lambda i: (i, 0)),
            # Constant block index: fetched once, stays resident across steps.
            pl.BlockSpec(rep.shape, lambda i: (0, 0)),
        ],
        out_specs=pl.BlockSpec((RT, out_cols), lambda i: (i, 0)),
        compiler_params=pltpu.CompilerParams(
            dimension_semantics=("parallel",),
            vmem_limit_bytes=vmem_limit,
        ),
        cost_estimate=cost,
    )(x_rows, rep)

    # (Rf, out_cols) == (R, sh*W_out) in row-major order -> NCHW output, free.
    return out_rows.reshape(N, C, H_out, W_out)


class Upsample:
    """Mirror of the PyTorch module, backed by the Pallas kernel."""

    def __init__(self, scale_factor, mode="nearest"):
        self.scale_factor = scale_factor
        self.mode = mode

    def __call__(self, x):
        return upsample_nearest(x, self.scale_factor, self.mode)


# --------------------------------------------------------------------------
# Self-test
# --------------------------------------------------------------------------
def _reference_nearest(x, sh, sw):
    N, C, H, W = x.shape
    idx_h = jnp.arange(H * sh) // sh
    idx_w = jnp.arange(W * sw) // sw
    return x[:, :, idx_h, :][:, :, :, idx_w]


if __name__ == "__main__":
    key = jax.random.PRNGKey(0)

    # Case 1: small plane (folded small-plane path), matches the module's use.
    N, C, H, W = 2, 4, 16, 16
    scale = 2
    x = jax.random.normal(key, (N, C, H, W), dtype=jnp.float32)
    y = jax.block_until_ready(Upsample(scale_factor=scale)(x))
    ref = _reference_nearest(x, scale, scale)
    assert y.shape == (N, C, H * scale, W * scale), y.shape
    assert jnp.allclose(y, ref, atol=0.0, rtol=0.0), "mismatch vs reference (case 1)"

    # Case 2: wide path (W*sw >= 128) with asymmetric scales.
    key2 = jax.random.PRNGKey(0)
    x2 = jax.random.normal(key2, (1, 2, 8, 64), dtype=jnp.float32)
    y2 = jax.block_until_ready(Upsample(scale_factor=(3, 2))(x2))
    ref2 = _reference_nearest(x2, 3, 2)
    assert y2.shape == (1, 2, 24, 128), y2.shape
    assert jnp.allclose(y2, ref2, atol=0.0, rtol=0.0), "mismatch vs reference (case 2)"

    print("KERNEL_OK")
</pallas_src>

<mosaic_0001>
module attributes {stable_mosaic.version = 11 : i64} {
  func.func @_upsample_kernel(%arg0: i32, %arg1: memref<16x64xf32, #tpu.memory_space<vmem>>, %arg2: memref<64x256xf32, #tpu.memory_space<vmem>>, %arg3: memref<16x256xf32, #tpu.memory_space<vmem>>) attributes {dimension_semantics = [#tpu.dimension_semantics<parallel>], iteration_bounds = array<i64: 2>, scalar_prefetch = 0 : i64, scratch_operands = 0 : i64, tpu.core_type = #tpu.core_type<tc>, window_params = [{transform_indices = @transform_0, window_bounds = array<i64: 16, 64>}, {pipeline_mode = #tpu.pipeline_mode<synchronous>, transform_indices = @transform_1, window_bounds = array<i64: 64, 256>}, {transform_indices = @transform_2, window_bounds = array<i64: 16, 256>}]} {
    %c0 = arith.constant 0 : index
    %c0_0 = arith.constant 0 : index
    %0 = vector.load %arg1[%c0, %c0_0] : memref<16x64xf32, #tpu.memory_space<vmem>>, vector<16x64xf32>
    %c0_1 = arith.constant 0 : index
    %c0_2 = arith.constant 0 : index
    %1 = vector.load %arg2[%c0_1, %c0_2] : memref<64x256xf32, #tpu.memory_space<vmem>>, vector<64x256xf32>
    %cst = arith.constant dense<0.000000e+00> : vector<16x256xf32>
    %2 = tpu.matmul %0, %1, %cst {dimension_numbers = #tpu.dot_dimension_numbers<[1], [0], [0], [1], [0, 0, 1, 1], [], []>} : vector<16x64xf32>, vector<64x256xf32>, vector<16x256xf32> -> vector<16x256xf32>
    %c0_3 = arith.constant 0 : index
    %c0_4 = arith.constant 0 : index
    %3 = vector.load %arg3[%c0_3, %c0_4] : memref<16x256xf32, #tpu.memory_space<vmem>>, vector<16x256xf32>
    tpu.vector_store %arg3[%c0_3, %c0_4], %2 {strides = array<i32>} : memref<16x256xf32, #tpu.memory_space<vmem>>, vector<16x256xf32>,
    return
  }
  func.func @transform_0(%arg0: i32) -> (i32, i32) {
    %c0_i32 = arith.constant 0 : i32
    %c0_i32_0 = arith.constant 0 : i32
    return %arg0, %c0_i32 : i32, i32
  }
  func.func @transform_1(%arg0: i32) -> (i32, i32) {
    %c0_i32 = arith.constant 0 : i32
    %c0_i32_0 = arith.constant 0 : i32
    %c0_i32_1 = arith.constant 0 : i32
    return %c0_i32, %c0_i32_0 : i32, i32
  }
  func.func @transform_2(%arg0: i32) -> (i32, i32) {
    %c0_i32 = arith.constant 0 : i32
    %c0_i32_0 = arith.constant 0 : i32
    return %arg0, %c0_i32 : i32, i32
  }
}

</mosaic_0001>

<llo_original>
// kernel: tpu_custom_call.1
$region0: #{tpu_custom_call.1}
  #allocation0 [shape = 'u32[]', space=smem, size = 0x4, offset = 0x4, fixed_abs, tag = 'smem constant byte address 0x4 - core index']
  #allocation1 [shape = 'u32[144,128]{1,0:T(1,128)}', space=vmem, size = 0x12000, scoped, tag = 'internal scratch']
  %s0 = inlined_call_operand.hbm [shape: f32[32,64], index: 0, kind: input, shape index: {}]
  %s1 = inlined_call_operand.hbm [shape: f32[64,256], index: 1, kind: input, shape index: {}]
  %s2 = inlined_call_operand.hbm [shape: f32[32,256], index: 2, kind: output, shape index: {}]
  %s3 = sld [smem:[#allocation0]]
  $region49: #{tpu_custom_call.1} parent=0
    _
  %s5 = ssub.s32 1, %s3
  %s6 = scalar_select 0, %s5, %s3
  $region1: #{tpu_custom_call.1} parent=0
    #allocation2 [shape = 'u8[16384]{0}', space=vmem, size = 0x4000, scoped, tag = 'input window, operand 0']
    #allocation3 [shape = 's32[2]{0}', space=sflag, size = 0x8, scoped, tag = 'scoped memory for tpu_custom_call.1']
    #allocation4 [shape = 's32[2]{0}', space=sflag, size = 0x8, scoped, tag = 'scoped memory for tpu_custom_call.1']
    #allocation5 [shape = 'u8[65536]{0}', space=vmem, size = 0x10000, scoped, tag = 'input window, operand 1, single buffered']
    #allocation6 [shape = 's32[1]{0}', space=sflag, size = 0x4, scoped, tag = 'scoped memory for tpu_custom_call.1']
    #allocation7 [shape = 'u8[32768]{0}', space=vmem, size = 0x8000, scoped, tag = 'output window, operand 0']
    %7 = vsyncpa [#allocation3], 0
    %s8 = scalar_lea.sflag [#allocation3], 1
    %9 = vsyncpa %s8, 0
    %10 = vsyncpa [#allocation6], 0
    %11 = vsyncpa [#allocation4], 0
    %s12 = scalar_lea.sflag [#allocation4], 1
    %13 = vsyncpa %s12, 0
    loop: start=0, step=1, limit=4
    $region2: #{tpu_custom_call.1} parent=1 // loop_pre_header
      _
    $region3: #{tpu_custom_call.1} parent=1 // loop_header
      %s15 = sphi 0, %s19
      %p16 = scmp.ge.s32.totalorder %s15, 4
      %s25 = sphi 0, %s27
      %s28 = sphi 0, %s25
      %s29 = sphi 0, %s28
      %s45 = sphi 0, %s29
      %s49 = sphi 0, %s49
      %s51 = sphi 0, %s49
      %s52 = sphi 0, %s51
      %s66 = sphi 0, %s52
      %s72 = sphi 0, %s74
      %s75 = sphi 0, %s72
      %s76 = sphi 0, %s75
      %s92 = sphi 0, %s76
    $region4: #{tpu_custom_call.1} parent=1 // loop_header_branch
      %18 = sbr.rel (%p16) target = $region8
    $region5: #{tpu_custom_call.1} parent=1 // loop_body
      %s20 = ssub.s32 %s15, 1
      %s21 = ssub.s32 %s15, 2
      %s22 = sadd.s32 %s15, 1
      %s23 = ssub.s32 %s15, %s22
      %p24 = scmp.eq.s32.totalorder %s23, 0
      %s26 = sadd.s32 %s25, 1
      %s27 = scalar_select %p24, %s25, %s26
      %p30 = pneg %p24
      %p31 = scmp.eq.s32.totalorder %s15, 1
      %p32 = por %p30, %p31
      %p33 = scmp.ne.s32.totalorder %s25, %s28
      %p34 = scmp.eq.s32.totalorder %s15, 0
      %p35 = por %p33, %p34
      %p36 = scmp.ne.s32.totalorder %s25, %s28
      %p37 = scmp.eq.s32.totalorder %s20, 1
      %p38 = por %p36, %p37
      %p39 = scmp.ne.s32.totalorder %s28, %s29
      %p40 = scmp.eq.s32.totalorder %s20, 0
      %p41 = por %p39, %p40
      %p42 = scmp.ne.s32.totalorder %s28, %s29
      %p43 = scmp.eq.s32.totalorder %s21, 1
      %p44 = por %p42, %p43
      %p46 = scmp.ne.s32.totalorder %s29, %s45
      %p47 = scmp.eq.s32.totalorder %s21, 0
      %p48 = por %p46, %p47
      %s50 = sadd.s32 %s49, 1
      %p53 = scmp.eq.s32.totalorder %s15, 1
      %p54 = scmp.ne.s32.totalorder %s49, %s51
      %p55 = scmp.eq.s32.totalorder %s15, 0
      %p56 = por %p54, %p55
      %p57 = scmp.ne.s32.totalorder %s49, %s51
      %p58 = scmp.eq.s32.totalorder %s20, 1
      %p59 = por %p57, %p58
      %p60 = scmp.ne.s32.totalorder %s51, %s52
      %p61 = scmp.eq.s32.totalorder %s20, 0
      %p62 = por %p60, %p61
      %p63 = scmp.ne.s32.totalorder %s51, %s52
      %p64 = scmp.eq.s32.totalorder %s21, 1
      %p65 = por %p63, %p64
      %p67 = scmp.ne.s32.totalorder %s52, %s66
      %p68 = scmp.eq.s32.totalorder %s21, 0
      %p69 = por %p67, %p68
      %s70 = ssub.s32 %s15, %s22
      %p71 = scmp.eq.s32.totalorder %s70, 0
      %s73 = sadd.s32 %s72, 1
      %s74 = scalar_select %p71, %s72, %s73
      %p77 = pneg %p71
      %p78 = scmp.eq.s32.totalorder %s15, 1
      %p79 = por %p77, %p78
      %p80 = scmp.ne.s32.totalorder %s72, %s75
      %p81 = scmp.eq.s32.totalorder %s15, 0
      %p82 = por %p80, %p81
      %p83 = scmp.ne.s32.totalorder %s72, %s75
      %p84 = scmp.eq.s32.totalorder %s20, 1
      %p85 = por %p83, %p84
      %p86 = scmp.ne.s32.totalorder %s75, %s76
      %p87 = scmp.eq.s32.totalorder %s20, 0
      %p88 = por %p86, %p87
      %p89 = scmp.ne.s32.totalorder %s75, %s76
      %p90 = scmp.eq.s32.totalorder %s21, 1
      %p91 = por %p89, %p90
      %p93 = scmp.ne.s32.totalorder %s76, %s92
      %p94 = scmp.eq.s32.totalorder %s21, 0
      %p95 = por %p93, %p94
      %p96 = scmp.le.s32.totalorder 1, %s15
      %p97 = scmp.lt.s32.totalorder %s15, 3
      %p98 = pnand %p96, %p97
      %p99 = pneg %p98
      // Predicated region
      $region9: #{tpu_custom_call.1} parent=5 // pred_check
        _
      $region10: #{tpu_custom_call.1} parent=5 // pred_check_branch
        %101 = sbr.rel (%p98) target = $region12
      $region11: #{tpu_custom_call.1} parent=5 // pred_region
        %s102 = ssub.s32 %s15, 1
        // Predicated region
        $region13: #{tpu_custom_call.1} parent=11 // pred_check
          %p103 = pneg %p62
        $region14: #{tpu_custom_call.1} parent=11 // pred_check_branch
          %105 = sbr.rel (%p103) target = $region16
        $region15: #{tpu_custom_call.1} parent=11 // pred_region
          %s107 = ssub.s32 2048, 2048
          %108 = vsyncadd [#allocation6], %s107
          %s109 = sshll.u32 [#allocation5], 4
          %s110 = int_to_ptr.vmem [resolvable:$true] %s109
          %115 = dma.hbm_to_vmem [thread:$0]  %s1, 2048, %s110, [#allocation6], 256, 256, 16
        $region16: #{tpu_custom_call.1} parent=11 // pred_fallthru
          _
      $region12: #{tpu_custom_call.1} parent=5 // pred_fallthru
        _
      %p116 = scmp.lt.s32.totalorder %s15, 2
      // Predicated region
      $region17: #{tpu_custom_call.1} parent=5 // pred_check
        %p117 = pneg %p116
      $region18: #{tpu_custom_call.1} parent=5 // pred_check_branch
        %119 = sbr.rel (%p117) target = $region20
      $region19: #{tpu_custom_call.1} parent=5 // pred_region
        // Predicated region
        $region21: #{tpu_custom_call.1} parent=19 // pred_check
          %p120 = pneg %p35
        $region22: #{tpu_custom_call.1} parent=19 // pred_check_branch
          %122 = sbr.rel (%p120) target = $region24
        $region23: #{tpu_custom_call.1} parent=19 // pred_region
          %s123 = sand.u32 %s25, 1
          %s124 = scalar_lea.sflag [#allocation3], %s123
          %s125 = sand.u32 %s25, 1
          %s126 = smul.addr %s125, 16
          %s127 = scalar_lea.vmem [#allocation2], %s126
          %s128 = smul.u32 2, %s15
          %s130 = ssub.s32 256, 256
          %131 = vsyncadd %s124, %s130
          %s132 = smul.addr %s128, 128
          %s133 = scalar_lea.hbm %s0, %s132
          %s134 = sshll.u32 %s127, 4
          %s135 = int_to_ptr.vmem [resolvable:$true] %s134
          %140 = dma.hbm_to_vmem [thread:$0]  %s133, 256, %s135, %s124, 128, 128, 8
        $region24: #{tpu_custom_call.1} parent=19 // pred_fallthru
          _
      $region20: #{tpu_custom_call.1} parent=5 // pred_fallthru
        _
      %p141 = scmp.le.s32.totalorder 1, %s15
      %p142 = scmp.lt.s32.totalorder %s15, 3
      %p143 = pnand %p141, %p142
      %p144 = pneg %p143
      // Predicated region
      $region25: #{tpu_custom_call.1} parent=5 // pred_check
        _
      $region26: #{tpu_custom_call.1} parent=5 // pred_check_branch
        %146 = sbr.rel (%p143) target = $region28
      $region27: #{tpu_custom_call.1} parent=5 // pred_region
        %s147 = ssub.s32 %s15, 1
        %s148 = sand.u32 %s28, 1
        %s149 = scalar_lea.sflag [#allocation3], %s148
        %s150 = sand.u32 %s28, 1
        %s151 = smul.addr %s150, 16
        %s152 = scalar_lea.vmem [#allocation2], %s151
        // Predicated region
        $region29: #{tpu_custom_call.1} parent=27 // pred_check
          %p153 = pneg %p41
        $region30: #{tpu_custom_call.1} parent=27 // pred_check_branch
          %155 = sbr.rel (%p153) target = $region32
        $region31: #{tpu_custom_call.1} parent=27 // pred_region
          %156 = dma.done %s149, 256
        $region32: #{tpu_custom_call.1} parent=27 // pred_fallthru
          _
        // Predicated region
        $region33: #{tpu_custom_call.1} parent=27 // pred_check
          %p157 = pneg %p62
        $region34: #{tpu_custom_call.1} parent=27 // pred_check_branch
          %159 = sbr.rel (%p157) target = $region36
        $region35: #{tpu_custom_call.1} parent=27 // pred_region
          %160 = dma.done [#allocation6], 2048
        $region36: #{tpu_custom_call.1} parent=27 // pred_fallthru
          _
        %s161 = sand.u32 %s28, 1
        %s162 = scalar_lea.sflag [#allocation3], %s161
        %s163 = sand.u32 %s28, 1
        %s164 = smul.addr %s163, 16
        %s165 = scalar_lea.vmem [#allocation2], %s164
        %p166 = pneg %p41
        %p167 = pneg %p38
        %p168 = pneg %p62
        %p169 = pneg %p59
        %p170 = pneg %p88
        %p171 = pneg %p85
        %s172 = sand.u32 %s75, 1
        %s173 = scalar_lea.sflag [#allocation4], %s172
        %s174 = sand.u32 %s75, 1
        %s175 = smul.addr %s174, 32
        %s176 = scalar_lea.vmem [#allocation7], %s175
        %s177 = smul.u32 2, %s20
        %s178 = smul.u32 2, %s20
        %v179 = vld [vmem:[%s152] sm:$0xff]
        %v180 = vld [vmem:[%s152 + $0x8] sm:$0xff]
        %v181 = vld [vmem:[#allocation5] sm:$0xff]
        %v182 = vld [vmem:[#allocation5 + $0x8] sm:$0xff]
        %v183 = vld [vmem:[#allocation5 + $0x10] sm:$0xff]
        %v184 = vld [vmem:[#allocation5 + $0x18] sm:$0xff]
        %v185 = vld [vmem:[#allocation5 + $0x20] sm:$0xff]
        %v186 = vld [vmem:[#allocation5 + $0x28] sm:$0xff]
        %v187 = vld [vmem:[#allocation5 + $0x30] sm:$0xff]
        %v188 = vld [vmem:[#allocation5 + $0x38] sm:$0xff]
        %v189 = vld [vmem:[#allocation5 + $0x40] sm:$0xff]
        %v190 = vld [vmem:[#allocation5 + $0x48] sm:$0xff]
        %v191 = vld [vmem:[#allocation5 + $0x50] sm:$0xff]
        %v192 = vld [vmem:[#allocation5 + $0x58] sm:$0xff]
        %v193 = vld [vmem:[#allocation5 + $0x60] sm:$0xff]
        %v194 = vld [vmem:[#allocation5 + $0x68] sm:$0xff]
        %v195 = vld [vmem:[#allocation5 + $0x70] sm:$0xff]
        %v196 = vld [vmem:[#allocation5 + $0x78] sm:$0xff]
        %vm197 = vcmask 523264
        %v199 = vsel %vm197, %v179, 0
        %v202 = vsel %vm197, %v180, 0
        %204 = vmatprep.subr.mxu0 %v182
        %205 = vmatpush1.msra.mxu0 %v181
        %206 = vmatprep.subr.mxu0 %v184
        %207 = vmatpush1.msra.mxu0 %v183
        %208 = vmatprep.subr.mxu0 %v186
        %209 = vmatpush1.msra.mxu0 %v185
        %210 = vmatprep.subr.mxu0 %v188
        %211 = vmatpush1.msra.mxu0 %v187
        %212 = vmatprep.subr.mxu0 %v190
        %213 = vmatpush1.msra.mxu0 %v189
        %214 = vmatprep.subr.mxu0 %v192
        %215 = vmatpush1.msra.mxu0 %v191
        %216 = vmatprep.subr.mxu0 %v194
        %217 = vmatpush1.msra.mxu0 %v193
        %218 = vmatprep.subr.mxu0 %v196
        %219 = vmatpush1.msra.mxu0 %v195
        %220 = vmatprep.subr.mxu0 0.0
        %221 = vmatpush1.msra.mxu0 0.0
        %222 = vmatprep.subr.mxu0 0.0
        %223 = vmatpush1.msra.mxu0 0.0
        %224 = vmatprep.subr.mxu0 0.0
        %225 = vmatpush1.msra.mxu0 0.0
        %226 = vmatprep.subr.mxu0 0.0
        %227 = vmatpush1.msra.mxu0 0.0
        %228 = vmatprep.subr.mxu0 0.0
        %229 = vmatpush1.msra.mxu0 0.0
        %230 = vmatprep.subr.mxu0 0.0
        %231 = vmatpush1.msra.mxu0 0.0
        %232 = vmatprep.subr.mxu0 0.0
        %233 = vmatpush1.msra.mxu0 0.0
        %234 = vmatprep.subr.mxu0 0.0
        %235 = vmatpush1.msra.mxu0 0.0
        %236 = vmatprep.subr.mxu0 0.0
        %237 = vmatpush1.msra.mxu0 0.0
        %238 = vmatprep.subr.mxu0 0.0
        %239 = vmatpush1.msra.mxu0 0.0
        %240 = vmatprep.subr.mxu0 0.0
        %241 = vmatpush1.msra.mxu0 0.0
        %242 = vmatprep.subr.mxu0 0.0
        %243 = vmatpush1.msra.mxu0 0.0
        %244 = vmatprep.subr.mxu0 0.0
        %245 = vmatpush1.msra.mxu0 0.0
        %246 = vmatprep.subr.mxu0 0.0
        %247 = vmatpush1.msra.mxu0 0.0
        %248 = vmatprep.subr.mxu0 0.0
        %249 = vmatpush1.msra.mxu0 0.0
        %250 = vmatprep.subr.mxu0 0.0
        %251 = vmatpush1.msra.mxu0 0.0
        %252 = vmatprep.subr.mxu0 0.0
        %253 = vmatpush1.msra.mxu0 0.0
        %254 = vmatprep.subr.mxu0 0.0
        %255 = vmatpush1.msra.mxu0 0.0
        %256 = vmatprep.subr.mxu0 0.0
        %257 = vmatpush1.msra.mxu0 0.0
        %258 = vmatprep.subr.mxu0 0.0
        %259 = vmatpush1.msra.mxu0 0.0
        %260 = vmatprep.subr.mxu0 0.0
        %261 = vmatpush1.msra.mxu0 0.0
        %262 = vmatprep.subr.mxu0 0.0
        %263 = vmatpush1.msra.mxu0 0.0
        %264 = vmatprep.subr.mxu0 0.0
        %265 = vmatpush1.msra.mxu0 0.0
        %266 = vmatprep.subr.mxu0 0.0
        %267 = vmatpush1.msra.mxu0 0.0
        %268 = vmatprep.mubr.f32.mxu0 0.0
        %269 = vmatmul.mubr.f32.gmra.mrb[0].mxu0 %v199
        %v270 = vpop.f32.mrb[0].mxu0
        %v271 = vadd.f32 0.0, %v270
        %v272 = vpop.f32.mrb[0].mxu0
        %v273 = vadd.f32 0.0, %v272
        %274 = vmatprep.mubr.f32.mxu0 0.0
        %275 = vmatmul.mubr.f32.gmra.mrb[0].mxu0 %v202
        %v276 = vpop.f32.mrb[0].mxu0
        %v277 = vadd.f32 0.0, %v276
        %v278 = vpop.f32.mrb[0].mxu0
        %v279 = vadd.f32 0.0, %v278
        %280 = vdwg.mxu0
        %281 = vst [vmem:[%s176] sm:$0xff] %v271
        %282 = vst [vmem:[%s176 + $0x8] sm:$0xff] %v273
        %283 = vst [vmem:[%s176 + $0x10] sm:$0xff] %v277
        %284 = vst [vmem:[%s176 + $0x18] sm:$0xff] %v279
        %s285 = sand.u32 %s75, 1
        %s286 = scalar_lea.sflag [#allocation4], %s285
        %s287 = sand.u32 %s75, 1
        %s288 = smul.addr %s287, 32
        %s289 = scalar_lea.vmem [#allocation7], %s288
        // Predicated region
        $region37: #{tpu_custom_call.1} parent=27 // pred_check
          %p290 = pneg %p85
        $region38: #{tpu_custom_call.1} parent=27 // pred_check_branch
          %292 = sbr.rel (%p290) target = $region40
        $region39: #{tpu_custom_call.1} parent=27 // pred_region
          %s293 = smul.u32 2, %s20
          %s295 = ssub.s32 512, 512
          %296 = vsyncadd %s286, %s295
          %s297 = smul.addr %s293, 2
          %s298 = smul.addr %s297, 128
          %s299 = scalar_lea.hbm %s2, %s298
          %s300 = sshll.u32 %s289, 4
          %s301 = int_to_ptr.vmem [resolvable:$true] %s300
          %306 = dma.vmem_to_hbm [thread:$0]  %s301, 512, %s299, %s286, 256, 256, 16
        $region40: #{tpu_custom_call.1} parent=27 // pred_fallthru
          _
      $region28: #{tpu_custom_call.1} parent=5 // pred_fallthru
        _
      %p307 = scmp.le.s32.totalorder 2, %s15
      // Predicated region
      $region41: #{tpu_custom_call.1} parent=5 // pred_check
        %p308 = pneg %p307
      $region42: #{tpu_custom_call.1} parent=5 // pred_check_branch
        %310 = sbr.rel (%p308) target = $region44
      $region43: #{tpu_custom_call.1} parent=5 // pred_region
        %s311 = ssub.s32 %s15, 2
        // Predicated region
        $region45: #{tpu_custom_call.1} parent=43 // pred_check
          %p312 = pneg %p91
        $region46: #{tpu_custom_call.1} parent=43 // pred_check_branch
          %314 = sbr.rel (%p312) target = $region48
        $region47: #{tpu_custom_call.1} parent=43 // pred_region
          %s315 = sand.u32 %s76, 1
          %s316 = scalar_lea.sflag [#allocation4], %s315
          %s317 = sand.u32 %s76, 1
          %s318 = smul.addr %s317, 32
          %s319 = scalar_lea.vmem [#allocation7], %s318
          %320 = dma.done %s316, 512
        $region48: #{tpu_custom_call.1} parent=43 // pred_fallthru
          _
      $region44: #{tpu_custom_call.1} parent=5 // pred_fallthru
        _
    $region6: #{tpu_custom_call.1} parent=1 // loop_footer
      %s19 = sadd.s32 1, %s15
    $region7: #{tpu_custom_call.1} parent=1 // loop_footer_branch
      %14 = sbr.rel target = $region3
    $region8: #{tpu_custom_call.1} parent=1 // loop_exit
      _
    %321 = vsyncpa [#allocation3], 1
    %s322 = scalar_lea.sflag [#allocation3], 1
    %323 = vsyncpa %s322, 1
    %324 = vsyncpa [#allocation6], 1
    %325 = vsyncpa [#allocation4], 1
    %s326 = scalar_lea.sflag [#allocation4], 1
    %327 = vsyncpa %s326, 1

</llo_original>
